<compile_context>
chip_gen: v6e
topology: v6e:2x2x1
jax: 0.10.0
libtpu: 0.0.40
codegen_flags: <defaults>
</compile_context>

<pallas_src>
import jax
import jax.numpy as jnp
from jax import lax
from jax.experimental import pallas as pl
from jax.experimental.pallas import tpu as pltpu

_LANE = 128


def _round_up(x, m):
    return ((x + m - 1) // m) * m


def _default_vmem_budget_bytes():
    """VMEM capacity (per core) with ~15% headroom; safe fallback = 64 MiB."""
    cap = 64 * 1024 * 1024
    try:
        info = pltpu.get_tpu_info()
        cap = int(getattr(info, "vmem_capacity_bytes", cap))
    except Exception:
        pass
    return int(cap * 0.85)


def _make_kernel(tb, compute_dtype):
    def kernel(x1_ref, x2_ref, y1_ref, r1_ref):
        # Per-batch processing bounds live ranges to one (Dp,Dp)+(Dp,Mp) f32
        # tile and lets the scheduler overlap store of batch i with matmuls
        # of batch i+1.
        def per_batch(i, carry):
            a = x1_ref[i]  # (Mp, Dp)
            b = x2_ref[i]  # (Dp, Mp)
            if compute_dtype is not None:
                # In-kernel cast (VPU slots with slack) — no extra HBM pass.
                a = a.astype(compute_dtype)
                b = b.astype(compute_dtype)

            # z = x2 @ x1  (= y1^T) : canonical [M,K]x[K,N] for the MXU.
            z = jnp.dot(b, a, preferred_element_type=jnp.float32)  # (Dp, Dp)

            # r1 = z @ x2 : canonical again.  (When compute_dtype is None and
            # inputs are f32, z stays f32 here -> full-precision second matmul,
            # matching the PyTorch reference.)
            r = jnp.dot(z.astype(b.dtype), b,
                        preferred_element_type=jnp.float32)        # (Dp, Mp)

            # y1 = z^T : only a small (Dp,Dp) tile transpose (XLU).
            y1_ref[i] = z.T.astype(y1_ref.dtype)
            r1_ref[i] = r.astype(r1_ref.dtype)
            return carry

        if tb == 1:
            per_batch(0, 0)
        else:
            lax.fori_loop(0, tb, per_batch, 0, unroll=(tb <= 8))

    return kernel


def permute_matmul(x1, x2, *, compute_dtype=None, vmem_budget_bytes=None):
    B, M, D = x1.shape
    B2, D2, M2 = x2.shape
    assert B == B2 and D == D2 and M == M2, "shapes must be (B,M,D) and (B,D,M)"

    out_dtype = x1.dtype
    in_dtype = x1.dtype

    # Pad M and D up to multiples of 128 only when needed so that input DMAs
    # and output stores are lane-dense (no masked vst).  Zero padding is
    # mathematically neutral for both contractions.
    Mp = _round_up(M, _LANE)
    Dp = _round_up(D, _LANE)
    padded = (Mp, Dp) != (M, D)
    if padded:
        x1 = jnp.pad(x1, ((0, 0), (0, Mp - M), (0, Dp - D)))
        x2 = jnp.pad(x2, ((0, 0), (0, Dp - D), (0, Mp - M)))

    if vmem_budget_bytes is None:
        vmem_budget_bytes = _default_vmem_budget_bytes()

    in_bytes = jnp.dtype(in_dtype).itemsize
    out_bytes = jnp.dtype(out_dtype).itemsize
    # Double-buffered inputs and outputs scale with tb; f32 intermediates are
    # per-batch (thanks to the in-kernel per-batch loop).
    per_batch = (2 * (Mp * Dp + Dp * Mp) * in_bytes
                 + 2 * (Dp * Dp + Dp * Mp) * out_bytes)
    interm = (Dp * Dp + Dp * Mp) * 4
    if compute_dtype is not None:
        interm += (Mp * Dp + Dp * Mp) * jnp.dtype(compute_dtype).itemsize

    if per_batch + interm > vmem_budget_bytes:
        # TODO(synk): add an M-tile grid axis with a (Dp,Dp) f32 VMEM scratch
        # accumulator so tb=1 always fits; for now fail loudly instead of
        # silently thrashing/spilling.
        raise NotImplementedError(
            "permute_matmul: single-batch block (%d bytes) exceeds the VMEM "
            "budget (%d bytes); M-tiling not yet implemented."
            % (per_batch + interm, vmem_budget_bytes))

    # Largest batch tile that (a) divides B, (b) fits the VMEM budget, and
    # (c) keeps the grid at >= min(B, 4) steps so pipelining and v7x megacore
    # sharding are preserved.
    max_tb = max(1, B // min(B, 4))
    tb = 1
    for cand in range(1, max_tb + 1):
        if B % cand == 0 and cand * per_batch + interm <= vmem_budget_bytes:
            tb = cand

    grid = (B // tb,)
    kernel = _make_kernel(tb, compute_dtype)

    y1_p, r1_p = pl.pallas_call(
        kernel,
        out_shape=(
            jax.ShapeDtypeStruct((B, Dp, Dp), out_dtype),  # y1 (padded)
            jax.ShapeDtypeStruct((B, Dp, Mp), out_dtype),  # r1 (padded)
        ),
        grid_spec=pltpu.PrefetchScalarGridSpec(
            num_scalar_prefetch=0,
            grid=grid,
            in_specs=[
                pl.BlockSpec((tb, Mp, Dp), lambda g: (g, 0, 0)),
                pl.BlockSpec((tb, Dp, Mp), lambda g: (g, 0, 0)),
            ],
            out_specs=[
                pl.BlockSpec((tb, Dp, Dp), lambda g: (g, 0, 0)),
                pl.BlockSpec((tb, Dp, Mp), lambda g: (g, 0, 0)),
            ],
        ),
        compiler_params=pltpu.CompilerParams(
            dimension_semantics=("parallel",),
            vmem_limit_bytes=int(vmem_budget_bytes),
        ),
    )(x1, x2)

    if padded:
        return y1_p[:, :D, :D], r1_p[:, :D, :M]
    return y1_p, r1_p


if __name__ == "__main__":
    B, M, D = 2, 16, 8
    key = jax.random.PRNGKey(0)
    k1, k2 = jax.random.split(key)
    x1 = jax.random.normal(k1, (B, M, D), dtype=jnp.float32)
    x2 = jax.random.normal(k2, (B, D, M), dtype=jnp.float32)

    y1, r1 = permute_matmul(x1, x2)
    jax.block_until_ready((y1, r1))

    # Reference (plain JAX), mirroring the PyTorch module exactly.
    t1 = jnp.transpose(x1, (0, 2, 1))                          # (B, D, M)
    t2 = jnp.transpose(x2, (0, 2, 1))                          # (B, M, D)
    y1_ref = jnp.matmul(t1, t2)                                # (B, D, D)
    r1_ref = jnp.matmul(jnp.transpose(y1_ref, (0, 2, 1)), x2)  # (B, D, M)

    assert jnp.allclose(y1, y1_ref, atol=1e-4, rtol=1e-4)
    assert jnp.allclose(r1, r1_ref, atol=1e-4, rtol=1e-4)

    print("KERNEL_OK")
</pallas_src>

<mosaic_0001>
module attributes {stable_mosaic.version = 11 : i64} {
  func.func @kernel(%arg0: i32, %arg1: memref<1x128x128xf32, #tpu.memory_space<vmem>>, %arg2: memref<1x128x128xf32, #tpu.memory_space<vmem>>, %arg3: memref<1x128x128xf32, #tpu.memory_space<vmem>>, %arg4: memref<1x128x128xf32, #tpu.memory_space<vmem>>) attributes {dimension_semantics = [#tpu.dimension_semantics<parallel>], iteration_bounds = array<i64: 2>, scalar_prefetch = 0 : i64, scratch_operands = 0 : i64, tpu.core_type = #tpu.core_type<tc>, window_params = [{transform_indices = @transform_0, window_bounds = array<i64: 1, 128, 128>}, {transform_indices = @transform_1, window_bounds = array<i64: 1, 128, 128>}, {transform_indices = @transform_2, window_bounds = array<i64: 1, 128, 128>}, {transform_indices = @transform_3, window_bounds = array<i64: 1, 128, 128>}]} {
    %c0 = arith.constant 0 : index
    %c0_0 = arith.constant 0 : index
    %c0_1 = arith.constant 0 : index
    %0 = vector.load %arg1[%c0, %c0_0, %c0_1] : memref<1x128x128xf32, #tpu.memory_space<vmem>>, vector<1x128x128xf32>
    %1 = vector.shape_cast %0 : vector<1x128x128xf32> to vector<128x128xf32>
    %c0_2 = arith.constant 0 : index
    %c0_3 = arith.constant 0 : index
    %c0_4 = arith.constant 0 : index
    %2 = vector.load %arg2[%c0_2, %c0_3, %c0_4] : memref<1x128x128xf32, #tpu.memory_space<vmem>>, vector<1x128x128xf32>
    %3 = vector.shape_cast %2 : vector<1x128x128xf32> to vector<128x128xf32>
    %cst = arith.constant dense<0.000000e+00> : vector<128x128xf32>
    %4 = tpu.matmul %3, %1, %cst {dimension_numbers = #tpu.dot_dimension_numbers<[1], [0], [0], [1], [0, 0, 1, 1], [], []>} : vector<128x128xf32>, vector<128x128xf32>, vector<128x128xf32> -> vector<128x128xf32>
    %cst_5 = arith.constant dense<0.000000e+00> : vector<128x128xf32>
    %5 = tpu.matmul %4, %3, %cst_5 {dimension_numbers = #tpu.dot_dimension_numbers<[1], [0], [0], [1], [0, 0, 1, 1], [], []>} : vector<128x128xf32>, vector<128x128xf32>, vector<128x128xf32> -> vector<128x128xf32>
    %6 = tpu.transpose %4, [1, 0] : vector<128x128xf32> -> vector<128x128xf32>
    %c0_6 = arith.constant 0 : index
    %c0_7 = arith.constant 0 : index
    %c0_8 = arith.constant 0 : index
    %7 = vector.load %arg3[%c0_6, %c0_7, %c0_8] : memref<1x128x128xf32, #tpu.memory_space<vmem>>, vector<1x128x128xf32>
    %8 = vector.shape_cast %7 : vector<1x128x128xf32> to vector<128x128xf32>
    %9 = vector.shape_cast %6 : vector<128x128xf32> to vector<1x128x128xf32>
    tpu.vector_store %arg3[%c0_6, %c0_7, %c0_8], %9 {strides = array<i32>} : memref<1x128x128xf32, #tpu.memory_space<vmem>>, vector<1x128x128xf32>,
    %c0_9 = arith.constant 0 : index
    %c0_10 = arith.constant 0 : index
    %c0_11 = arith.constant 0 : index
    %10 = vector.load %arg4[%c0_9, %c0_10, %c0_11] : memref<1x128x128xf32, #tpu.memory_space<vmem>>, vector<1x128x128xf32>
    %11 = vector.shape_cast %10 : vector<1x128x128xf32> to vector<128x128xf32>
    %12 = vector.shape_cast %5 : vector<128x128xf32> to vector<1x128x128xf32>
    tpu.vector_store %arg4[%c0_9, %c0_10, %c0_11], %12 {strides = array<i32>} : memref<1x128x128xf32, #tpu.memory_space<vmem>>, vector<1x128x128xf32>,
    return
  }
  func.func @transform_0(%arg0: i32) -> (i32, i32, i32) {
    %c0_i32 = arith.constant 0 : i32
    %c0_i32_0 = arith.constant 0 : i32
    %c0_i32_1 = arith.constant 0 : i32
    return %arg0, %c0_i32, %c0_i32_0 : i32, i32, i32
  }
  func.func @transform_1(%arg0: i32) -> (i32, i32, i32) {
    %c0_i32 = arith.constant 0 : i32
    %c0_i32_0 = arith.constant 0 : i32
    %c0_i32_1 = arith.constant 0 : i32
    return %arg0, %c0_i32, %c0_i32_0 : i32, i32, i32
  }
  func.func @transform_2(%arg0: i32) -> (i32, i32, i32) {
    %c0_i32 = arith.constant 0 : i32
    %c0_i32_0 = arith.constant 0 : i32
    %c0_i32_1 = arith.constant 0 : i32
    return %arg0, %c0_i32, %c0_i32_0 : i32, i32, i32
  }
  func.func @transform_3(%arg0: i32) -> (i32, i32, i32) {
    %c0_i32 = arith.constant 0 : i32
    %c0_i32_0 = arith.constant 0 : i32
    %c0_i32_1 = arith.constant 0 : i32
    return %arg0, %c0_i32, %c0_i32_0 : i32, i32, i32
  }
}

</mosaic_0001>

<llo_original>
// kernel: tpu_custom_call.1
$region0: #{tpu_custom_call.1}
  #allocation0 [shape = 'u32[]', space=smem, size = 0x4, offset = 0x4, fixed_abs, tag = 'smem constant byte address 0x4 - core index']
  #allocation1 [shape = 'u32[144,128]{1,0:T(1,128)}', space=vmem, size = 0x12000, scoped, tag = 'internal scratch']
  %s0 = inlined_call_operand.hbm [shape: f32[2,128,128], index: 0, kind: input, shape index: {}]
  %s1 = inlined_call_operand.hbm [shape: f32[2,128,128], index: 1, kind: input, shape index: {}]
  %s2 = inlined_call_operand.hbm [shape: f32[2,128,128], index: 2, kind: output, shape index: {0}]
  %s3 = inlined_call_operand.hbm [shape: f32[2,128,128], index: 3, kind: output, shape index: {1}]
  %4 = xla_tuple %s2, %s3
  %s5 = sld [smem:[#allocation0]]
  $region57: #{tpu_custom_call.1} parent=0
    _
  %s7 = ssub.s32 1, %s5
  %s8 = scalar_select 0, %s7, %s5
  $region1: #{tpu_custom_call.1} parent=0
    #allocation2 [shape = 'u8[131072]{0}', space=vmem, size = 0x20000, scoped, tag = 'input window, operand 0']
    #allocation3 [shape = 's32[2]{0}', space=sflag, size = 0x8, scoped, tag = 'scoped memory for tpu_custom_call.1']
    #allocation4 [shape = 's32[2]{0}', space=sflag, size = 0x8, scoped, tag = 'scoped memory for tpu_custom_call.1']
    #allocation5 [shape = 'u8[131072]{0}', space=vmem, size = 0x20000, scoped, tag = 'input window, operand 1']
    #allocation6 [shape = 's32[2]{0}', space=sflag, size = 0x8, scoped, tag = 'scoped memory for tpu_custom_call.1']
    #allocation7 [shape = 'u8[131072]{0}', space=vmem, size = 0x20000, scoped, tag = 'output window, operand 0']
    #allocation8 [shape = 'u8[131072]{0}', space=vmem, size = 0x20000, scoped, tag = 'output window, operand 1']
    #allocation9 [shape = 's32[2]{0}', space=sflag, size = 0x8, scoped, tag = 'scoped memory for tpu_custom_call.1']
    %9 = vsyncpa [#allocation3], 0
    %s10 = scalar_lea.sflag [#allocation3], 1
    %11 = vsyncpa %s10, 0
    %12 = vsyncpa [#allocation6], 0
    %s13 = scalar_lea.sflag [#allocation6], 1
    %14 = vsyncpa %s13, 0
    %15 = vsyncpa [#allocation4], 0
    %s16 = scalar_lea.sflag [#allocation4], 1
    %17 = vsyncpa %s16, 0
    %18 = vsyncpa [#allocation9], 0
    %s19 = scalar_lea.sflag [#allocation9], 1
    %20 = vsyncpa %s19, 0
    loop: start=0, step=1, limit=4
    $region2: #{tpu_custom_call.1} parent=1 // loop_pre_header
      _
    $region3: #{tpu_custom_call.1} parent=1 // loop_header
      %s22 = sphi 0, %s26
      %p23 = scmp.ge.s32.totalorder %s22, 4
      %s32 = sphi 0, %s34
      %s35 = sphi 0, %s32
      %s36 = sphi 0, %s35
      %s52 = sphi 0, %s36
      %s58 = sphi 0, %s60
      %s61 = sphi 0, %s58
      %s62 = sphi 0, %s61
      %s78 = sphi 0, %s62
      %s84 = sphi 0, %s86
      %s87 = sphi 0, %s84
      %s88 = sphi 0, %s87
      %s104 = sphi 0, %s88
      %s110 = sphi 0, %s112
      %s113 = sphi 0, %s110
      %s114 = sphi 0, %s113
      %s130 = sphi 0, %s114
    $region4: #{tpu_custom_call.1} parent=1 // loop_header_branch
      %25 = sbr.rel (%p23) target = $region8
    $region5: #{tpu_custom_call.1} parent=1 // loop_body
      %s27 = ssub.s32 %s22, 1
      %s28 = ssub.s32 %s22, 2
      %s29 = sadd.s32 %s22, 1
      %s30 = ssub.s32 %s22, %s29
      %p31 = scmp.eq.s32.totalorder %s30, 0
      %s33 = sadd.s32 %s32, 1
      %s34 = scalar_select %p31, %s32, %s33
      %p37 = pneg %p31
      %p38 = scmp.eq.s32.totalorder %s22, 1
      %p39 = por %p37, %p38
      %p40 = scmp.ne.s32.totalorder %s32, %s35
      %p41 = scmp.eq.s32.totalorder %s22, 0
      %p42 = por %p40, %p41
      %p43 = scmp.ne.s32.totalorder %s32, %s35
      %p44 = scmp.eq.s32.totalorder %s27, 1
      %p45 = por %p43, %p44
      %p46 = scmp.ne.s32.totalorder %s35, %s36
      %p47 = scmp.eq.s32.totalorder %s27, 0
      %p48 = por %p46, %p47
      %p49 = scmp.ne.s32.totalorder %s35, %s36
      %p50 = scmp.eq.s32.totalorder %s28, 1
      %p51 = por %p49, %p50
      %p53 = scmp.ne.s32.totalorder %s36, %s52
      %p54 = scmp.eq.s32.totalorder %s28, 0
      %p55 = por %p53, %p54
      %s56 = ssub.s32 %s22, %s29
      %p57 = scmp.eq.s32.totalorder %s56, 0
      %s59 = sadd.s32 %s58, 1
      %s60 = scalar_select %p57, %s58, %s59
      %p63 = pneg %p57
      %p64 = scmp.eq.s32.totalorder %s22, 1
      %p65 = por %p63, %p64
      %p66 = scmp.ne.s32.totalorder %s58, %s61
      %p67 = scmp.eq.s32.totalorder %s22, 0
      %p68 = por %p66, %p67
      %p69 = scmp.ne.s32.totalorder %s58, %s61
      %p70 = scmp.eq.s32.totalorder %s27, 1
      %p71 = por %p69, %p70
      %p72 = scmp.ne.s32.totalorder %s61, %s62
      %p73 = scmp.eq.s32.totalorder %s27, 0
      %p74 = por %p72, %p73
      %p75 = scmp.ne.s32.totalorder %s61, %s62
      %p76 = scmp.eq.s32.totalorder %s28, 1
      %p77 = por %p75, %p76
      %p79 = scmp.ne.s32.totalorder %s62, %s78
      %p80 = scmp.eq.s32.totalorder %s28, 0
      %p81 = por %p79, %p80
      %s82 = ssub.s32 %s22, %s29
      %p83 = scmp.eq.s32.totalorder %s82, 0
      %s85 = sadd.s32 %s84, 1
      %s86 = scalar_select %p83, %s84, %s85
      %p89 = pneg %p83
      %p90 = scmp.eq.s32.totalorder %s22, 1
      %p91 = por %p89, %p90
      %p92 = scmp.ne.s32.totalorder %s84, %s87
      %p93 = scmp.eq.s32.totalorder %s22, 0
      %p94 = por %p92, %p93
      %p95 = scmp.ne.s32.totalorder %s84, %s87
      %p96 = scmp.eq.s32.totalorder %s27, 1
      %p97 = por %p95, %p96
      %p98 = scmp.ne.s32.totalorder %s87, %s88
      %p99 = scmp.eq.s32.totalorder %s27, 0
      %p100 = por %p98, %p99
      %p101 = scmp.ne.s32.totalorder %s87, %s88
      %p102 = scmp.eq.s32.totalorder %s28, 1
      %p103 = por %p101, %p102
      %p105 = scmp.ne.s32.totalorder %s88, %s104
      %p106 = scmp.eq.s32.totalorder %s28, 0
      %p107 = por %p105, %p106
      %s108 = ssub.s32 %s22, %s29
      %p109 = scmp.eq.s32.totalorder %s108, 0
      %s111 = sadd.s32 %s110, 1
      %s112 = scalar_select %p109, %s110, %s111
      %p115 = pneg %p109
      %p116 = scmp.eq.s32.totalorder %s22, 1
      %p117 = por %p115, %p116
      %p118 = scmp.ne.s32.totalorder %s110, %s113
      %p119 = scmp.eq.s32.totalorder %s22, 0
      %p120 = por %p118, %p119
      %p121 = scmp.ne.s32.totalorder %s110, %s113
      %p122 = scmp.eq.s32.totalorder %s27, 1
      %p123 = por %p121, %p122
      %p124 = scmp.ne.s32.totalorder %s113, %s114
      %p125 = scmp.eq.s32.totalorder %s27, 0
      %p126 = por %p124, %p125
      %p127 = scmp.ne.s32.totalorder %s113, %s114
      %p128 = scmp.eq.s32.totalorder %s28, 1
      %p129 = por %p127, %p128
      %p131 = scmp.ne.s32.totalorder %s114, %s130
      %p132 = scmp.eq.s32.totalorder %s28, 0
      %p133 = por %p131, %p132
      %p134 = scmp.le.s32.totalorder 1, %s22
      %p135 = scmp.lt.s32.totalorder %s22, 3
      %p136 = pnand %p134, %p135
      %p137 = pneg %p136
      // Predicated region
      $region9: #{tpu_custom_call.1} parent=5 // pred_check
        _
      $region10: #{tpu_custom_call.1} parent=5 // pred_check_branch
        %139 = sbr.rel (%p136) target = $region12
      $region11: #{tpu_custom_call.1} parent=5 // pred_region
        %s140 = ssub.s32 %s22, 1
      $region12: #{tpu_custom_call.1} parent=5 // pred_fallthru
        _
      %p141 = scmp.lt.s32.totalorder %s22, 2
      // Predicated region
      $region13: #{tpu_custom_call.1} parent=5 // pred_check
        %p142 = pneg %p141
      $region14: #{tpu_custom_call.1} parent=5 // pred_check_branch
        %144 = sbr.rel (%p142) target = $region16
      $region15: #{tpu_custom_call.1} parent=5 // pred_region
        // Predicated region
        $region17: #{tpu_custom_call.1} parent=15 // pred_check
          %p145 = pneg %p42
        $region18: #{tpu_custom_call.1} parent=15 // pred_check_branch
          %147 = sbr.rel (%p145) target = $region20
        $region19: #{tpu_custom_call.1} parent=15 // pred_region
          %s148 = sand.u32 %s32, 1
          %s149 = scalar_lea.sflag [#allocation3], %s148
          %s150 = sand.u32 %s32, 1
          %s151 = smul.addr %s150, 128
          %s152 = scalar_lea.vmem [#allocation2], %s151
          %s154 = ssub.s32 2048, 2048
          %155 = vsyncadd %s149, %s154
          %s156 = smul.addr %s22, 16
          %s157 = smul.addr %s156, 128
          %s158 = scalar_lea.hbm %s0, %s157
          %s159 = sshll.u32 %s152, 4
          %s160 = int_to_ptr.vmem [resolvable:$true] %s159
          %165 = dma.hbm_to_vmem [thread:$0]  %s158, 2048, %s160, %s149, 128, 128, 8
        $region20: #{tpu_custom_call.1} parent=15 // pred_fallthru
          _
        // Predicated region
        $region21: #{tpu_custom_call.1} parent=15 // pred_check
          %p166 = pneg %p68
        $region22: #{tpu_custom_call.1} parent=15 // pred_check_branch
          %168 = sbr.rel (%p166) target = $region24
        $region23: #{tpu_custom_call.1} parent=15 // pred_region
          %s169 = sand.u32 %s58, 1
          %s170 = scalar_lea.sflag [#allocation6], %s169
          %s171 = sand.u32 %s58, 1
          %s172 = smul.addr %s171, 128
          %s173 = scalar_lea.vmem [#allocation5], %s172
          %s175 = ssub.s32 2048, 2048
          %176 = vsyncadd %s170, %s175
          %s177 = smul.addr %s22, 16
          %s178 = smul.addr %s177, 128
          %s179 = scalar_lea.hbm %s1, %s178
          %s180 = sshll.u32 %s173, 4
          %s181 = int_to_ptr.vmem [resolvable:$true] %s180
          %186 = dma.hbm_to_vmem [thread:$0]  %s179, 2048, %s181, %s170, 128, 128, 8
        $region24: #{tpu_custom_call.1} parent=15 // pred_fallthru
          _
      $region16: #{tpu_custom_call.1} parent=5 // pred_fallthru
        _
      %p187 = scmp.le.s32.totalorder 1, %s22
      %p188 = scmp.lt.s32.totalorder %s22, 3
      %p189 = pnand %p187, %p188
      %p190 = pneg %p189
      // Predicated region
      $region25: #{tpu_custom_call.1} parent=5 // pred_check
        _
      $region26: #{tpu_custom_call.1} parent=5 // pred_check_branch
        %192 = sbr.rel (%p189) target = $region28
      $region27: #{tpu_custom_call.1} parent=5 // pred_region
        %s193 = ssub.s32 %s22, 1
        %s194 = sand.u32 %s35, 1
        %s195 = scalar_lea.sflag [#allocation3], %s194
        %s196 = sand.u32 %s35, 1
        %s197 = smul.addr %s196, 128
        %s198 = scalar_lea.vmem [#allocation2], %s197
        // Predicated region
        $region29: #{tpu_custom_call.1} parent=27 // pred_check
          %p199 = pneg %p48
        $region30: #{tpu_custom_call.1} parent=27 // pred_check_branch
          %201 = sbr.rel (%p199) target = $region32
        $region31: #{tpu_custom_call.1} parent=27 // pred_region
          %202 = dma.done %s195, 2048
        $region32: #{tpu_custom_call.1} parent=27 // pred_fallthru
          _
        %s203 = sand.u32 %s61, 1
        %s204 = scalar_lea.sflag [#allocation6], %s203
        %s205 = sand.u32 %s61, 1
        %s206 = smul.addr %s205, 128
        %s207 = scalar_lea.vmem [#allocation5], %s206
        // Predicated region
        $region33: #{tpu_custom_call.1} parent=27 // pred_check
          %p208 = pneg %p74
        $region34: #{tpu_custom_call.1} parent=27 // pred_check_branch
          %210 = sbr.rel (%p208) target = $region36
        $region35: #{tpu_custom_call.1} parent=27 // pred_region
          %211 = dma.done %s204, 2048
        $region36: #{tpu_custom_call.1} parent=27 // pred_fallthru
          _
        %s212 = sand.u32 %s35, 1
        %s213 = scalar_lea.sflag [#allocation3], %s212
        %s214 = sand.u32 %s35, 1
        %s215 = smul.addr %s214, 128
        %s216 = scalar_lea.vmem [#allocation2], %s215
        %p217 = pneg %p48
        %p218 = pneg %p45
        %s219 = sand.u32 %s61, 1
        %s220 = scalar_lea.sflag [#allocation6], %s219
        %s221 = sand.u32 %s61, 1
        %s222 = smul.addr %s221, 128
        %s223 = scalar_lea.vmem [#allocation5], %s222
        %p224 = pneg %p74
        %p225 = pneg %p71
        %p226 = pneg %p100
        %p227 = pneg %p97
        %s228 = sand.u32 %s87, 1
        %s229 = scalar_lea.sflag [#allocation4], %s228
        %s230 = sand.u32 %s87, 1
        %s231 = smul.addr %s230, 128
        %s232 = scalar_lea.vmem [#allocation7], %s231
        %p233 = pneg %p126
        %p234 = pneg %p123
        %s235 = sand.u32 %s113, 1
        %s236 = scalar_lea.sflag [#allocation9], %s235
        %s237 = sand.u32 %s113, 1
        %s238 = smul.addr %s237, 128
        %s239 = scalar_lea.vmem [#allocation8], %s238
        %v240 = vld [vmem:[%s198] sm:$0xff]
        %v241 = vld [vmem:[%s198 + $0x8] sm:$0xff]
        %v242 = vld [vmem:[%s198 + $0x10] sm:$0xff]
        %v243 = vld [vmem:[%s198 + $0x18] sm:$0xff]
        %v244 = vld [vmem:[%s198 + $0x20] sm:$0xff]
        %v245 = vld [vmem:[%s198 + $0x28] sm:$0xff]
        %v246 = vld [vmem:[%s198 + $0x30] sm:$0xff]
        %v247 = vld [vmem:[%s198 + $0x38] sm:$0xff]
        %v248 = vld [vmem:[%s198 + $0x40] sm:$0xff]
        %v249 = vld [vmem:[%s198 + $0x48] sm:$0xff]
        %v250 = vld [vmem:[%s198 + $0x50] sm:$0xff]
        %v251 = vld [vmem:[%s198 + $0x58] sm:$0xff]
        %v252 = vld [vmem:[%s198 + $0x60] sm:$0xff]
        %v253 = vld [vmem:[%s198 + $0x68] sm:$0xff]
        %v254 = vld [vmem:[%s198 + $0x70] sm:$0xff]
        %v255 = vld [vmem:[%s198 + $0x78] sm:$0xff]
        %v256 = vld [vmem:[%s207] sm:$0xff]
        %v257 = vld [vmem:[%s207 + $0x8] sm:$0xff]
        %v258 = vld [vmem:[%s207 + $0x10] sm:$0xff]
        %v259 = vld [vmem:[%s207 + $0x18] sm:$0xff]
        %v260 = vld [vmem:[%s207 + $0x20] sm:$0xff]
        %v261 = vld [vmem:[%s207 + $0x28] sm:$0xff]
        %v262 = vld [vmem:[%s207 + $0x30] sm:$0xff]
        %v263 = vld [vmem:[%s207 + $0x38] sm:$0xff]
        %v264 = vld [vmem:[%s207 + $0x40] sm:$0xff]
        %v265 = vld [vmem:[%s207 + $0x48] sm:$0xff]
        %v266 = vld [vmem:[%s207 + $0x50] sm:$0xff]
        %v267 = vld [vmem:[%s207 + $0x58] sm:$0xff]
        %v268 = vld [vmem:[%s207 + $0x60] sm:$0xff]
        %v269 = vld [vmem:[%s207 + $0x68] sm:$0xff]
        %v270 = vld [vmem:[%s207 + $0x70] sm:$0xff]
        %v271 = vld [vmem:[%s207 + $0x78] sm:$0xff]
        %272 = vmatprep.subr.mxu0 0.0
        %273 = vmatpush1.msra.mxu0 %v255
        %274 = vmatprep.subr.mxu0 0.0
        %275 = vmatpush1.msra.mxu0 %v254
        %276 = vmatprep.subr.mxu0 0.0
        %277 = vmatpush1.msra.mxu0 %v253
        %278 = vmatprep.subr.mxu0 0.0
        %279 = vmatpush1.msra.mxu0 %v252
        %280 = vmatprep.subr.mxu0 0.0
        %281 = vmatpush1.msra.mxu0 %v251
        %282 = vmatprep.subr.mxu0 0.0
        %283 = vmatpush1.msra.mxu0 %v250
        %284 = vmatprep.subr.mxu0 0.0
        %285 = vmatpush1.msra.mxu0 %v249
        %286 = vmatprep.subr.mxu0 0.0
        %287 = vmatpush1.msra.mxu0 %v248
        %288 = vmatprep.subr.mxu0 0.0
        %289 = vmatpush1.msra.mxu0 %v247
        %290 = vmatprep.subr.mxu0 0.0
        %291 = vmatpush1.msra.mxu0 %v246
        %292 = vmatprep.subr.mxu0 0.0
        %293 = vmatpush1.msra.mxu0 %v245
        %294 = vmatprep.subr.mxu0 0.0
        %295 = vmatpush1.msra.mxu0 %v244
        %296 = vmatprep.subr.mxu0 0.0
        %297 = vmatpush1.msra.mxu0 %v243
        %298 = vmatprep.subr.mxu0 0.0
        %299 = vmatpush1.msra.mxu0 %v242
        %300 = vmatprep.subr.mxu0 0.0
        %301 = vmatpush1.msra.mxu0 %v241
        %302 = vmatprep.subr.mxu0 0.0
        %303 = vmatpush1.msra.mxu0 %v240
        %304 = vmatprep.subr.mxu0 0.0
        %305 = vmatpush2.msra.mxu0 0.0
        %306 = vmatprep.subr.mxu0 0.0
        %307 = vmatpush2.msra.mxu0 0.0
        %308 = vmatprep.subr.mxu0 0.0
        %309 = vmatpush2.msra.mxu0 0.0
        %310 = vmatprep.subr.mxu0 0.0
        %311 = vmatpush2.msra.mxu0 0.0
        %312 = vmatprep.subr.mxu0 0.0
        %313 = vmatpush2.msra.mxu0 0.0
        %314 = vmatprep.subr.mxu0 0.0
        %315 = vmatpush2.msra.mxu0 0.0
        %316 = vmatprep.subr.mxu0 0.0
        %317 = vmatpush2.msra.mxu0 0.0
        %318 = vmatprep.subr.mxu0 0.0
        %319 = vmatpush2.msra.mxu0 0.0
        %320 = vmatprep.subr.mxu0 0.0
        %321 = vmatpush2.msra.mxu0 0.0
        %322 = vmatprep.subr.mxu0 0.0
        %323 = vmatpush2.msra.mxu0 0.0
        %324 = vmatprep.subr.mxu0 0.0
        %325 = vmatpush2.msra.mxu0 0.0
        %326 = vmatprep.subr.mxu0 0.0
        %327 = vmatpush2.msra.mxu0 0.0
        %328 = vmatprep.subr.mxu0 0.0
        %329 = vmatpush2.msra.mxu0 0.0
        %330 = vmatprep.subr.mxu0 0.0
        %331 = vmatpush2.msra.mxu0 0.0
        %332 = vmatprep.subr.mxu0 0.0
        %333 = vmatpush2.msra.mxu0 0.0
        %334 = vmatprep.subr.mxu0 0.0
        %335 = vmatpush2.msra.mxu0 0.0
        %336 = vmatprep.mubr.f32.mxu0 0.0
        %337 = vmatmul.mubr.f32.gmra.mxu0 %v256
        %v338 = vpop.f32.mrf.mxu0
        %v339 = vadd.f32 0.0, %v338
        %v340 = vpop.f32.mrf.mxu0
        %341 = vmatprep.mubr.f32.mxu0 0.0
        %342 = vmatmul.mubr.f32.gmra.mxu0 %v257
        %v343 = vpop.f32.mrf.mxu0
        %v344 = vadd.f32 0.0, %v343
        %v345 = vpop.f32.mrf.mxu0
        %346 = vmatprep.mubr.f32.mxu0 0.0
        %347 = vmatmul.mubr.f32.gmra.mxu0 %v258
        %v348 = vpop.f32.mrf.mxu0
        %v349 = vadd.f32 0.0, %v348
        %v350 = vpop.f32.mrf.mxu0
        %351 = vmatprep.mubr.f32.mxu0 0.0
        %352 = vmatmul.mubr.f32.gmra.mxu0 %v259
        %v353 = vpop.f32.mrf.mxu0
        %v354 = vadd.f32 0.0, %v353
        %v355 = vpop.f32.mrf.mxu0
        %356 = vmatprep.mubr.f32.mxu0 0.0
        %357 = vmatmul.mubr.f32.gmra.mxu0 %v260
        %v358 = vpop.f32.mrf.mxu0
        %v359 = vadd.f32 0.0, %v358
        %v360 = vpop.f32.mrf.mxu0
        %361 = vmatprep.mubr.f32.mxu0 0.0
        %362 = vmatmul.mubr.f32.gmra.mxu0 %v261
        %v363 = vpop.f32.mrf.mxu0
        %v364 = vadd.f32 0.0, %v363
        %v365 = vpop.f32.mrf.mxu0
        %366 = vmatprep.mubr.f32.mxu0 0.0
        %367 = vmatmul.mubr.f32.gmra.mxu0 %v262
        %v368 = vpop.f32.mrf.mxu0
        %v369 = vadd.f32 0.0, %v368
        %v370 = vpop.f32.mrf.mxu0
        %371 = vmatprep.mubr.f32.mxu0 0.0
        %372 = vmatmul.mubr.f32.gmra.mxu0 %v263
        %v373 = vpop.f32.mrf.mxu0
        %v374 = vadd.f32 0.0, %v373
        %v375 = vpop.f32.mrf.mxu0
        %376 = vmatprep.mubr.f32.mxu0 0.0
        %377 = vmatmul.mubr.f32.gmra.mxu0 %v264
        %v378 = vpop.f32.mrf.mxu0
        %v379 = vadd.f32 0.0, %v378
        %v380 = vpop.f32.mrf.mxu0
        %381 = vmatprep.mubr.f32.mxu0 0.0
        %382 = vmatmul.mubr.f32.gmra.mxu0 %v265
        %v383 = vpop.f32.mrf.mxu0
        %v384 = vadd.f32 0.0, %v383
        %v385 = vpop.f32.mrf.mxu0
        %386 = vmatprep.mubr.f32.mxu0 0.0
        %387 = vmatmul.mubr.f32.gmra.mxu0 %v266
        %v388 = vpop.f32.mrf.mxu0
        %v389 = vadd.f32 0.0, %v388
        %v390 = vpop.f32.mrf.mxu0
        %391 = vmatprep.mubr.f32.mxu0 0.0
        %392 = vmatmul.mubr.f32.gmra.mxu0 %v267
        %v393 = vpop.f32.mrf.mxu0
        %v394 = vadd.f32 0.0, %v393
        %v395 = vpop.f32.mrf.mxu0
        %396 = vmatprep.mubr.f32.mxu0 0.0
        %397 = vmatmul.mubr.f32.gmra.mxu0 %v268
        %v398 = vpop.f32.mrf.mxu0
        %v399 = vadd.f32 0.0, %v398
        %v400 = vpop.f32.mrf.mxu0
        %401 = vmatprep.mubr.f32.mxu0 0.0
        %402 = vmatmul.mubr.f32.gmra.mxu0 %v269
        %v403 = vpop.f32.mrf.mxu0
        %v404 = vadd.f32 0.0, %v403
        %v405 = vpop.f32.mrf.mxu0
        %406 = vmatprep.mubr.f32.mxu0 0.0
        %407 = vmatmul.mubr.f32.gmra.mxu0 %v270
        %v408 = vpop.f32.mrf.mxu0
        %v409 = vadd.f32 0.0, %v408
        %v410 = vpop.f32.mrf.mxu0
        %411 = vmatprep.mubr.f32.mxu0 0.0
        %412 = vmatmul.mubr.f32.gmra.mxu0 %v271
        %v413 = vpop.f32.mrf.mxu0
        %v414 = vadd.f32 0.0, %v413
        %v415 = vpop.f32.mrf.mxu0
        %416 = vdwg.mxu0
        %417 = vmatprep.subr.mxu0 0.0
        %418 = vmatpush1.msra.mxu0 %v271
        %419 = vmatprep.subr.mxu0 0.0
        %420 = vmatpush1.msra.mxu0 %v270
        %421 = vmatprep.subr.mxu0 0.0
        %422 = vmatpush1.msra.mxu0 %v269
        %423 = vmatprep.subr.mxu0 0.0
        %424 = vmatpush1.msra.mxu0 %v268
        %425 = vmatprep.subr.mxu0 0.0
        %426 = vmatpush1.msra.mxu0 %v267
        %427 = vmatprep.subr.mxu0 0.0
        %428 = vmatpush1.msra.mxu0 %v266
        %429 = vmatprep.subr.mxu0 0.0
        %430 = vmatpush1.msra.mxu0 %v265
        %431 = vmatprep.subr.mxu0 0.0
        %432 = vmatpush1.msra.mxu0 %v264
        %433 = vmatprep.subr.mxu0 0.0
        %434 = vmatpush1.msra.mxu0 %v263
        %435 = vmatprep.subr.mxu0 0.0
        %436 = vmatpush1.msra.mxu0 %v262
        %437 = vmatprep.subr.mxu0 0.0
        %438 = vmatpush1.msra.mxu0 %v261
        %439 = vmatprep.subr.mxu0 0.0
        %440 = vmatpush1.msra.mxu0 %v260
        %441 = vmatprep.subr.mxu0 0.0
        %442 = vmatpush1.msra.mxu0 %v259
        %443 = vmatprep.subr.mxu0 0.0
        %444 = vmatpush1.msra.mxu0 %v258
        %445 = vmatprep.subr.mxu0 0.0
        %446 = vmatpush1.msra.mxu0 %v257
        %447 = vmatprep.subr.mxu0 0.0
        %448 = vmatpush1.msra.mxu0 %v256
        %449 = vmatprep.subr.mxu0 0.0
        %450 = vmatpush2.msra.mxu0 0.0
        %451 = vmatprep.subr.mxu0 0.0
        %452 = vmatpush2.msra.mxu0 0.0
        %453 = vmatprep.subr.mxu0 0.0
        %454 = vmatpush2.msra.mxu0 0.0
        %455 = vmatprep.subr.mxu0 0.0
        %456 = vmatpush2.msra.mxu0 0.0
        %457 = vmatprep.subr.mxu0 0.0
        %458 = vmatpush2.msra.mxu0 0.0
        %459 = vmatprep.subr.mxu0 0.0
        %460 = vmatpush2.msra.mxu0 0.0
        %461 = vmatprep.subr.mxu0 0.0
        %462 = vmatpush2.msra.mxu0 0.0
        %463 = vmatprep.subr.mxu0 0.0
        %464 = vmatpush2.msra.mxu0 0.0
        %465 = vmatprep.subr.mxu0 0.0
        %466 = vmatpush2.msra.mxu0 0.0
        %467 = vmatprep.subr.mxu0 0.0
        %468 = vmatpush2.msra.mxu0 0.0
        %469 = vmatprep.subr.mxu0 0.0
        %470 = vmatpush2.msra.mxu0 0.0
        %471 = vmatprep.subr.mxu0 0.0
        %472 = vmatpush2.msra.mxu0 0.0
        %473 = vmatprep.subr.mxu0 0.0
        %474 = vmatpush2.msra.mxu0 0.0
        %475 = vmatprep.subr.mxu0 0.0
        %476 = vmatpush2.msra.mxu0 0.0
        %477 = vmatprep.subr.mxu0 0.0
        %478 = vmatpush2.msra.mxu0 0.0
        %479 = vmatprep.subr.mxu0 0.0
        %480 = vmatpush2.msra.mxu0 0.0
        %481 = vmatprep.mubr.f32.mxu0 0.0
        %482 = vmatmul.mubr.f32.gmra.mxu0 %v339
        %v483 = vpop.f32.mrf.mxu0
        %v484 = vadd.f32 0.0, %v483
        %v485 = vpop.f32.mrf.mxu0
        %486 = vmatprep.mubr.f32.mxu0 0.0
        %487 = vmatmul.mubr.f32.gmra.mxu0 %v344
        %v488 = vpop.f32.mrf.mxu0
        %v489 = vadd.f32 0.0, %v488
        %v490 = vpop.f32.mrf.mxu0
        %491 = vmatprep.mubr.f32.mxu0 0.0
        %492 = vmatmul.mubr.f32.gmra.mxu0 %v349
        %v493 = vpop.f32.mrf.mxu0
        %v494 = vadd.f32 0.0, %v493
        %v495 = vpop.f32.mrf.mxu0
        %496 = vmatprep.mubr.f32.mxu0 0.0
        %497 = vmatmul.mubr.f32.gmra.mxu0 %v354
        %v498 = vpop.f32.mrf.mxu0
        %v499 = vadd.f32 0.0, %v498
        %v500 = vpop.f32.mrf.mxu0
        %501 = vmatprep.mubr.f32.mxu0 0.0
        %502 = vmatmul.mubr.f32.gmra.mxu0 %v359
        %v503 = vpop.f32.mrf.mxu0
        %v504 = vadd.f32 0.0, %v503
        %v505 = vpop.f32.mrf.mxu0
        %506 = vmatprep.mubr.f32.mxu0 0.0
        %507 = vmatmul.mubr.f32.gmra.mxu0 %v364
        %v508 = vpop.f32.mrf.mxu0
        %v509 = vadd.f32 0.0, %v508
        %v510 = vpop.f32.mrf.mxu0
        %511 = vmatprep.mubr.f32.mxu0 0.0
        %512 = vmatmul.mubr.f32.gmra.mxu0 %v369
        %v513 = vpop.f32.mrf.mxu0
        %v514 = vadd.f32 0.0, %v513
        %v515 = vpop.f32.mrf.mxu0
        %516 = vmatprep.mubr.f32.mxu0 0.0
        %517 = vmatmul.mubr.f32.gmra.mxu0 %v374
        %v518 = vpop.f32.mrf.mxu0
        %v519 = vadd.f32 0.0, %v518
        %v520 = vpop.f32.mrf.mxu0
        %521 = vmatprep.mubr.f32.mxu0 0.0
        %522 = vmatmul.mubr.f32.gmra.mxu0 %v379
        %v523 = vpop.f32.mrf.mxu0
        %v524 = vadd.f32 0.0, %v523
        %v525 = vpop.f32.mrf.mxu0
        %526 = vmatprep.mubr.f32.mxu0 0.0
        %527 = vmatmul.mubr.f32.gmra.mxu0 %v384
        %v528 = vpop.f32.mrf.mxu0
        %v529 = vadd.f32 0.0, %v528
        %v530 = vpop.f32.mrf.mxu0
        %531 = vmatprep.mubr.f32.mxu0 0.0
        %532 = vmatmul.mubr.f32.gmra.mxu0 %v389
        %v533 = vpop.f32.mrf.mxu0
        %v534 = vadd.f32 0.0, %v533
        %v535 = vpop.f32.mrf.mxu0
        %536 = vmatprep.mubr.f32.mxu0 0.0
        %537 = vmatmul.mubr.f32.gmra.mxu0 %v394
        %v538 = vpop.f32.mrf.mxu0
        %v539 = vadd.f32 0.0, %v538
        %v540 = vpop.f32.mrf.mxu0
        %541 = vmatprep.mubr.f32.mxu0 0.0
        %542 = vmatmul.mubr.f32.gmra.mxu0 %v399
        %v543 = vpop.f32.mrf.mxu0
        %v544 = vadd.f32 0.0, %v543
        %v545 = vpop.f32.mrf.mxu0
        %546 = vmatprep.mubr.f32.mxu0 0.0
        %547 = vmatmul.mubr.f32.gmra.mxu0 %v404
        %v548 = vpop.f32.mrf.mxu0
        %v549 = vadd.f32 0.0, %v548
        %v550 = vpop.f32.mrf.mxu0
        %551 = vmatprep.mubr.f32.mxu0 0.0
        %552 = vmatmul.mubr.f32.gmra.mxu0 %v409
        %v553 = vpop.f32.mrf.mxu0
        %v554 = vadd.f32 0.0, %v553
        %v555 = vpop.f32.mrf.mxu0
        %556 = vmatprep.mubr.f32.mxu0 0.0
        %557 = vmatmul.mubr.f32.gmra.mxu0 %v414
        %v558 = vpop.f32.mrf.mxu0
        %v559 = vadd.f32 0.0, %v558
        %v560 = vpop.f32.mrf.mxu0
        %561 = vdwg.mxu0
        %562 = vxpose.xlu0.b32.start [1/16] %v339, 128
        %563 = vxpose.xlu0.b32.cont [2/16] %v344, 128
        %564 = vxpose.xlu0.b32.cont [3/16] %v349, 128
        %565 = vxpose.xlu0.b32.cont [4/16] %v354, 128
        %566 = vxpose.xlu0.b32.cont [5/16] %v359, 128
        %567 = vxpose.xlu0.b32.cont [6/16] %v364, 128
        %568 = vxpose.xlu0.b32.cont [7/16] %v369, 128
        %569 = vxpose.xlu0.b32.cont [8/16] %v374, 128
        %570 = vxpose.xlu0.b32.cont [9/16] %v379, 128
        %571 = vxpose.xlu0.b32.cont [10/16] %v384, 128
        %572 = vxpose.xlu0.b32.cont [11/16] %v389, 128
        %573 = vxpose.xlu0.b32.cont [12/16] %v394, 128
        %574 = vxpose.xlu0.b32.cont [13/16] %v399, 128
        %575 = vxpose.xlu0.b32.cont [14/16] %v404, 128
        %576 = vxpose.xlu0.b32.cont [15/16] %v409, 128
        %577 = vxpose.xlu0.b32.end [16/16] %v414, 128
        %v578 = vpop.trf.xlu0
        %v579 = vpop.trf.xlu0
        %v580 = vpop.trf.xlu0
        %v581 = vpop.trf.xlu0
        %v582 = vpop.trf.xlu0
        %v583 = vpop.trf.xlu0
        %v584 = vpop.trf.xlu0
        %v585 = vpop.trf.xlu0
        %v586 = vpop.trf.xlu0
        %v587 = vpop.trf.xlu0
        %v588 = vpop.trf.xlu0
        %v589 = vpop.trf.xlu0
        %v590 = vpop.trf.xlu0
        %v591 = vpop.trf.xlu0
        %v592 = vpop.trf.xlu0
        %v593 = vpop.trf.xlu0
        %594 = vst [vmem:[%s232] sm:$0xff] %v578
        %595 = vst [vmem:[%s232 + $0x8] sm:$0xff] %v579
        %596 = vst [vmem:[%s232 + $0x10] sm:$0xff] %v580
        %597 = vst [vmem:[%s232 + $0x18] sm:$0xff] %v581
        %598 = vst [vmem:[%s232 + $0x20] sm:$0xff] %v582
        %599 = vst [vmem:[%s232 + $0x28] sm:$0xff] %v583
        %600 = vst [vmem:[%s232 + $0x30] sm:$0xff] %v584
        %601 = vst [vmem:[%s232 + $0x38] sm:$0xff] %v585
        %602 = vst [vmem:[%s232 + $0x40] sm:$0xff] %v586
        %603 = vst [vmem:[%s232 + $0x48] sm:$0xff] %v587
        %604 = vst [vmem:[%s232 + $0x50] sm:$0xff] %v588
        %605 = vst [vmem:[%s232 + $0x58] sm:$0xff] %v589
        %606 = vst [vmem:[%s232 + $0x60] sm:$0xff] %v590
        %607 = vst [vmem:[%s232 + $0x68] sm:$0xff] %v591
        %608 = vst [vmem:[%s232 + $0x70] sm:$0xff] %v592
        %609 = vst [vmem:[%s232 + $0x78] sm:$0xff] %v593
        %610 = vst [vmem:[%s239] sm:$0xff] %v484
        %611 = vst [vmem:[%s239 + $0x8] sm:$0xff] %v489
        %612 = vst [vmem:[%s239 + $0x10] sm:$0xff] %v494
        %613 = vst [vmem:[%s239 + $0x18] sm:$0xff] %v499
        %614 = vst [vmem:[%s239 + $0x20] sm:$0xff] %v504
        %615 = vst [vmem:[%s239 + $0x28] sm:$0xff] %v509
        %616 = vst [vmem:[%s239 + $0x30] sm:$0xff] %v514
        %617 = vst [vmem:[%s239 + $0x38] sm:$0xff] %v519
        %618 = vst [vmem:[%s239 + $0x40] sm:$0xff] %v524
        %619 = vst [vmem:[%s239 + $0x48] sm:$0xff] %v529
        %620 = vst [vmem:[%s239 + $0x50] sm:$0xff] %v534
        %621 = vst [vmem:[%s239 + $0x58] sm:$0xff] %v539
        %622 = vst [vmem:[%s239 + $0x60] sm:$0xff] %v544
        %623 = vst [vmem:[%s239 + $0x68] sm:$0xff] %v549
        %624 = vst [vmem:[%s239 + $0x70] sm:$0xff] %v554
        %625 = vst [vmem:[%s239 + $0x78] sm:$0xff] %v559
        %s626 = sand.u32 %s87, 1
        %s627 = scalar_lea.sflag [#allocation4], %s626
        %s628 = sand.u32 %s87, 1
        %s629 = smul.addr %s628, 128
        %s630 = scalar_lea.vmem [#allocation7], %s629
        %s631 = sand.u32 %s113, 1
        %s632 = scalar_lea.sflag [#allocation9], %s631
        %s633 = sand.u32 %s113, 1
        %s634 = smul.addr %s633, 128
        %s635 = scalar_lea.vmem [#allocation8], %s634
        // Predicated region
        $region37: #{tpu_custom_call.1} parent=27 // pred_check
          %p636 = pneg %p97
        $region38: #{tpu_custom_call.1} parent=27 // pred_check_branch
          %638 = sbr.rel (%p636) target = $region40
        $region39: #{tpu_custom_call.1} parent=27 // pred_region
          %s640 = ssub.s32 2048, 2048
          %641 = vsyncadd %s627, %s640
          %s642 = smul.addr %s27, 16
          %s643 = smul.addr %s642, 128
          %s644 = scalar_lea.hbm %s2, %s643
          %s645 = sshll.u32 %s630, 4
          %s646 = int_to_ptr.vmem [resolvable:$true] %s645
          %651 = dma.vmem_to_hbm [thread:$0]  %s646, 2048, %s644, %s627, 128, 128, 8
        $region40: #{tpu_custom_call.1} parent=27 // pred_fallthru
          _
        // Predicated region
        $region41: #{tpu_custom_call.1} parent=27 // pred_check
          %p652 = pneg %p123
        $region42: #{tpu_custom_call.1} parent=27 // pred_check_branch
          %654 = sbr.rel (%p652) target = $region44
        $region43: #{tpu_custom_call.1} parent=27 // pred_region
          %s656 = ssub.s32 2048, 2048
          %657 = vsyncadd %s632, %s656
          %s658 = smul.addr %s27, 16
          %s659 = smul.addr %s658, 128
          %s660 = scalar_lea.hbm %s3, %s659
          %s661 = sshll.u32 %s635, 4
          %s662 = int_to_ptr.vmem [resolvable:$true] %s661
          %667 = dma.vmem_to_hbm [thread:$0]  %s662, 2048, %s660, %s632, 128, 128, 8
        $region44: #{tpu_custom_call.1} parent=27 // pred_fallthru
          _
      $region28: #{tpu_custom_call.1} parent=5 // pred_fallthru
        _
      %p668 = scmp.le.s32.totalorder 2, %s22
      // Predicated region
      $region45: #{tpu_custom_call.1} parent=5 // pred_check
        %p669 = pneg %p668
      $region46: #{tpu_custom_call.1} parent=5 // pred_check_branch
        %671 = sbr.rel (%p669) target = $region48
      $region47: #{tpu_custom_call.1} parent=5 // pred_region
        %s672 = ssub.s32 %s22, 2
        // Predicated region
        $region49: #{tpu_custom_call.1} parent=47 // pred_check
          %p673 = pneg %p103
        $region50: #{tpu_custom_call.1} parent=47 // pred_check_branch
          %675 = sbr.rel (%p673) target = $region52
        $region51: #{tpu_custom_call.1} parent=47 // pred_region
          %s676 = sand.u32 %s88, 1
          %s677 = scalar_lea.sflag [#allocation4], %s676
          %s678 = sand.u32 %s88, 1
          %s679 = smul.addr %s678, 128
          %s680 = scalar_lea.vmem [#allocation7], %s679
          %681 = dma.done %s677, 2048
        $region52: #{tpu_custom_call.1} parent=47 // pred_fallthru
          _
        // Predicated region
        $region53: #{tpu_custom_call.1} parent=47 // pred_check
          %p682 = pneg %p129
        $region54: #{tpu_custom_call.1} parent=47 // pred_check_branch
          %684 = sbr.rel (%p682) target = $region56
        $region55: #{tpu_custom_call.1} parent=47 // pred_region
          %s685 = sand.u32 %s114, 1
          %s686 = scalar_lea.sflag [#allocation9], %s685
          %s687 = sand.u32 %s114, 1
          %s688 = smul.addr %s687, 128
          %s689 = scalar_lea.vmem [#allocation8], %s688
          %690 = dma.done %s686, 2048
        $region56: #{tpu_custom_call.1} parent=47 // pred_fallthru
          _
      $region48: #{tpu_custom_call.1} parent=5 // pred_fallthru
        _
    $region6: #{tpu_custom_call.1} parent=1 // loop_footer
      %s26 = sadd.s32 1, %s22
    $region7: #{tpu_custom_call.1} parent=1 // loop_footer_branch
      %21 = sbr.rel target = $region3
    $region8: #{tpu_custom_call.1} parent=1 // loop_exit
      _
    %691 = vsyncpa [#allocation3], 1
    %s692 = scalar_lea.sflag [#allocation3], 1
    %693 = vsyncpa %s692, 1
    %694 = vsyncpa [#allocation6], 1
    %s695 = scalar_lea.sflag [#allocation6], 1
    %696 = vsyncpa %s695, 1
    %697 = vsyncpa [#allocation4], 1
    %s698 = scalar_lea.sflag [#allocation4], 1
    %699 = vsyncpa %s698, 1
    %700 = vsyncpa [#allocation9], 1
    %s701 = scalar_lea.sflag [#allocation9], 1
    %702 = vsyncpa %s701, 1

</llo_original>
